<compile_context>
chip_gen: v6e
topology: v6e:2x2x1
jax: 0.10.0
libtpu: 0.0.40
codegen_flags: <defaults>
</compile_context>

<pallas_src>
import functools

import jax
import jax.numpy as jnp
from jax import lax
from jax.experimental import pallas as pl
from jax.experimental.pallas import tpu as pltpu


# --------------------------------------------------------------------------
# helpers
# --------------------------------------------------------------------------
def _round_up(v, m):
    return ((v + m - 1) // m) * m


def _sublane(dtype):
    """Second-to-last-dim packing granule for a dtype (8/16/32)."""
    return max(8, 32 // jnp.dtype(dtype).itemsize)


def _pick_tile(padded_dim, pref, granule):
    """Largest multiple of `granule` that divides `padded_dim` and is <= pref.

    `padded_dim` must itself be a multiple of `granule`, so a valid tile
    always exists (worst case: `granule`).
    """
    pref = max(granule, min(pref, padded_dim))
    best = granule
    t = granule
    while t <= pref:
        if padded_dim % t == 0:
            best = t
        t += granule
    return best


# --------------------------------------------------------------------------
# kernel
# --------------------------------------------------------------------------
def _make_dense_kernel(compute_dtype, use_scratch):
    """Builds the (tm, tn) output-tile kernel accumulating over the K grid axis.

    x_ref: (tm, tk)   activation tile
    w_ref: (tk, tn)   pre-transposed weight tile (no in-kernel transpose)
    b_ref: (1,  tn)   f32 bias tile (used to initialize the accumulator)
    o_ref: (tm, tn)   output tile (doubles as accumulator when f32)
    acc  : (tm, tn)   f32 VMEM scratch, only for low-precision outputs
    """

    def kernel(x_ref, w_ref, b_ref, o_ref, *scratch):
        acc_ref = scratch[0] if use_scratch else o_ref
        k = pl.program_id(2)

        @pl.when(k == 0)
        def _init():
            # Start the accumulator at the (broadcast) bias; keeps the K loop
            # a pure MXU accumulate with no separate bias pass.
            acc_ref[...] = jnp.broadcast_to(
                b_ref[...].astype(jnp.float32), acc_ref.shape)

        x_t = x_ref[...]
        w_t = w_ref[...]
        if compute_dtype is not None:
            x_t = x_t.astype(compute_dtype)   # e.g. bf16 feed for v6e/v7x MXU
            w_t = w_t.astype(compute_dtype)

        acc_ref[...] += lax.dot_general(
            x_t, w_t,
            dimension_numbers=(((1,), (0,)), ((), ())),
            preferred_element_type=jnp.float32,
        )

        if use_scratch:
            @pl.when(k == pl.num_programs(2) - 1)
            def _finalize():
                o_ref[...] = acc_ref[...].astype(o_ref.dtype)

    return kernel


# --------------------------------------------------------------------------
# pallas_call wrapper (2-D GEMM with pre-padded weight)
# --------------------------------------------------------------------------
def _dense_pallas_2d(x, w_pad, b_pad, *, d_out, tm_pref, tn_pref, tk_pref,
                     compute_dtype):
    """x: (B, D_in); w_pad: (Kp, Np) pre-transposed + 128-padded; b_pad: (1, Np)."""
    B, D_in = x.shape
    Kp, Np = w_pad.shape

    out_dtype = x.dtype
    x_it = jnp.dtype(x.dtype).itemsize
    w_it = jnp.dtype(w_pad.dtype).itemsize
    out_it = jnp.dtype(out_dtype).itemsize

    # Effective in-kernel compute dtype (must be a single dtype for the MXU).
    cd = compute_dtype
    if cd is None and jnp.dtype(x.dtype) != jnp.dtype(w_pad.dtype):
        cd = jnp.promote_types(x.dtype, w_pad.dtype)

    use_scratch = jnp.dtype(out_dtype) != jnp.dtype(jnp.float32)

    # ---- tile selection (dtype-aware sublane granule on M) -----------------
    sub_m = max(_sublane(x.dtype), _sublane(out_dtype))
    Mp0 = _round_up(B, sub_m)
    tm = _pick_tile(Mp0, tm_pref, sub_m)
    if tm < min(tm_pref, 128):
        # Awkward batch factorization: pad M up instead of using tiny tiles.
        tm = min(tm_pref, Mp0)
    Mp = _round_up(B, tm)

    # Keep >= 2 blocks on the N (parallel) axis when the M grid collapses to 1
    # so both v7x TensorCores get work (harmless on single-TC v5e/v6e).
    tn_cap = tn_pref
    if Np >= 256 and (Mp // tm) < 2:
        tn_cap = min(tn_pref, max(128, (Np // 2) // 128 * 128))
    tn = _pick_tile(Np, tn_cap, 128)
    tk = _pick_tile(Kp, tk_pref, 128)

    # ---- per-call activation padding (weight/bias were padded at prep) -----
    if (Mp, Kp) != (B, D_in):
        x = jnp.pad(x, ((0, Mp - B), (0, Kp - D_in)))

    grid = (Mp // tm, Np // tn, Kp // tk)

    # ---- advisory cost estimate (real element sizes) ------------------------
    flops = 2 * Mp * Kp * Np
    bytes_accessed = (Mp * Kp * x_it + Kp * Np * w_it + Mp * Np * out_it
                      + Np * 4)

    # ---- VMEM budget from actual buffer sizes (double-buffered pipeline) ----
    vmem_bytes = (2 * (tm * tk * x_it + tk * tn * w_it + tn * 4)
                  + 2 * tm * tn * out_it
                  + (tm * tn * 4 if use_scratch else 0))
    vmem_limit = int(min(64 << 20, max(int(vmem_bytes * 1.5), 8 << 20)))

    kernel = _make_dense_kernel(cd, use_scratch)
    scratch_shapes = [pltpu.VMEM((tm, tn), jnp.float32)] if use_scratch else []

    out = pl.pallas_call(
        kernel,
        out_shape=jax.ShapeDtypeStruct((Mp, Np), out_dtype),
        grid_spec=pltpu.PrefetchScalarGridSpec(
            num_scalar_prefetch=0,
            grid=grid,
            in_specs=[
                pl.BlockSpec((tm, tk), lambda i, j, k: (i, k)),   # x tile
                pl.BlockSpec((tk, tn), lambda i, j, k: (k, j)),   # W^T tile
                pl.BlockSpec((1, tn), lambda i, j, k: (0, j)),    # bias tile
            ],
            out_specs=pl.BlockSpec((tm, tn), lambda i, j, k: (i, j)),
            scratch_shapes=scratch_shapes,
        ),
        compiler_params=pltpu.CompilerParams(
            dimension_semantics=("parallel", "parallel", "arbitrary"),
            vmem_limit_bytes=vmem_limit,
        ),
        cost_estimate=pl.CostEstimate(
            flops=flops, transcendentals=0, bytes_accessed=bytes_accessed),
    )(x, w_pad, b_pad)

    return out[:B, :d_out]


# --------------------------------------------------------------------------
# public API
# --------------------------------------------------------------------------
def prepare_dense_params(weight, bias, *, weight_dtype=None):
    """One-time prep: transpose weight to (D_in, D_out) and pad to lane multiples.

    weight: (D_out, D_in)  PyTorch nn.Linear layout
    bias:   (D_out,)
    Returns (w_pad (Kp, Np), b_pad (1, Np) float32).
    """
    D_out, D_in = weight.shape
    if weight_dtype is not None:
        weight = weight.astype(weight_dtype)
    w_t = weight.T                                # (D_in, D_out), no per-call transpose
    Kp = _round_up(D_in, 128)
    Np = _round_up(D_out, 128)
    w_pad = jnp.pad(w_t, ((0, Kp - D_in), (0, Np - D_out)))
    b_pad = jnp.pad(bias.astype(jnp.float32).reshape(1, D_out),
                    ((0, 0), (0, Np - D_out)))
    return w_pad, b_pad


def make_dense_fn(weight, bias, *, tm=512, tn=512, tk=2048,
                  compute_dtype=None, weight_dtype=None,
                  min_macs_for_pallas=1 << 20):
    """Returns forward(x) computing Linear(x)[..., None, None] with a Pallas GEMM.

    weight: (D_out, D_in) PyTorch layout; bias: (D_out,).
    Weight is transposed/padded once here (not per call).
    """
    D_out, D_in = weight.shape
    w_pad, b_pad = prepare_dense_params(weight, bias, weight_dtype=weight_dtype)
    w_small = w_pad[:D_in, :D_out]    # unpadded transposed weight for the fallback
    b_small = b_pad[0, :D_out]

    pallas_fwd = jax.jit(functools.partial(
        _dense_pallas_2d, d_out=D_out, tm_pref=tm, tn_pref=tn, tk_pref=tk,
        compute_dtype=compute_dtype))

    @jax.jit
    def small_fwd(x2d, w_t, b):
        xx = x2d if compute_dtype is None else x2d.astype(compute_dtype)
        ww = w_t if compute_dtype is None else w_t.astype(compute_dtype)
        y = jnp.dot(xx, ww, preferred_element_type=jnp.float32) + b
        return y.astype(x2d.dtype)

    def forward(x):
        assert x.shape[-1] == D_in, "last dim of x must equal input_dim"
        lead = x.shape[:-1]
        x2d = x.reshape((-1, D_in))
        B = x2d.shape[0]
        if B * D_in * D_out < min_macs_for_pallas:
            # Tiny problem: pallas_call fixed overhead dominates -> fused XLA dot.
            y = small_fwd(x2d, w_small, b_small)
        else:
            y = pallas_fwd(x2d, w_pad, b_pad)
        # Trailing [..., None, None] is metadata-only (matches the PyTorch module).
        return y.reshape(lead + (D_out, 1, 1))

    return forward


def dense_forward(x, weight, bias, **kwargs):
    """Convenience one-shot wrapper (prep + forward)."""
    return make_dense_fn(weight, bias, **kwargs)(x)


# --------------------------------------------------------------------------
# self-test
# --------------------------------------------------------------------------
if __name__ == "__main__":
    key = jax.random.PRNGKey(0)

    def init_linear(k, d_in, d_out, dtype=jnp.float32):
        kw, kb = jax.random.split(k)
        bound = 1.0 / (d_in ** 0.5)
        w = jax.random.uniform(kw, (d_out, d_in), minval=-bound, maxval=bound,
                               dtype=dtype)
        b = jax.random.uniform(kb, (d_out,), minval=-bound, maxval=bound,
                               dtype=dtype)
        return w, b

    def ref_dense(x, w, b, precision=None):
        y = jnp.dot(x.astype(jnp.float32), w.astype(jnp.float32).T,
                    precision=precision) + b.astype(jnp.float32)
        return y[..., None, None]

    # --- Test 1: module-implied small shape, forced through the Pallas kernel.
    B, D_in, D_out = 2, 32, 16
    k1, k2, key = jax.random.split(key, 3)
    x = jax.random.normal(k1, (B, D_in), dtype=jnp.float32)
    w, b = init_linear(k2, D_in, D_out)
    fwd = make_dense_fn(w, b, min_macs_for_pallas=0)      # force Pallas path
    y = jax.block_until_ready(fwd(x))
    y_ref = ref_dense(x, w, b)
    assert y.shape == (B, D_out, 1, 1)
    assert jnp.allclose(y, y_ref, atol=1e-5, rtol=1e-5), "tiny Pallas test failed"

    # --- Test 2: same shape through the small-problem XLA fallback.
    y2 = jax.block_until_ready(make_dense_fn(w, b)(x))     # default threshold
    assert jnp.allclose(y2, y_ref, atol=1e-5, rtol=1e-5), "fallback test failed"

    # --- Test 3: medium f32, exercises K accumulation + multi-N-block grid.
    B, D_in, D_out = 256, 512, 384
    k1, k2, key = jax.random.split(key, 3)
    x = jax.random.normal(k1, (B, D_in), dtype=jnp.float32)
    w, b = init_linear(k2, D_in, D_out)
    fwd = make_dense_fn(w, b, tk=256)                      # tk=256 -> 2 K steps
    y = jax.block_until_ready(fwd(x))
    y_ref = ref_dense(x, w, b, precision=jax.lax.Precision.HIGHEST)
    assert y.shape == (B, D_out, 1, 1)
    assert jnp.allclose(y, y_ref, atol=2e-2, rtol=2e-2), "f32 medium test failed"

    # --- Test 4: bf16 weight storage + bf16 MXU feed (f32 activations/output).
    fwd_bf16w = make_dense_fn(w, b, weight_dtype=jnp.bfloat16,
                              compute_dtype=jnp.bfloat16, tk=256)
    y = jax.block_until_ready(fwd_bf16w(x))
    assert jnp.allclose(y, y_ref, atol=1e-1, rtol=5e-2), "bf16-weight test failed"

    # --- Test 5: fully bf16 (dtype-aware sublane + scratch-accumulator path).
    B, D_in, D_out = 64, 384, 256
    k1, k2, key = jax.random.split(key, 3)
    x = jax.random.normal(k1, (B, D_in), dtype=jnp.bfloat16)
    w, b = init_linear(k2, D_in, D_out, dtype=jnp.bfloat16)
    fwd = make_dense_fn(w, b, tk=128)                      # 3 K steps
    y = jax.block_until_ready(fwd(x))
    y_ref = ref_dense(x, w, b, precision=jax.lax.Precision.HIGHEST)
    assert y.shape == (B, D_out, 1, 1)
    assert jnp.allclose(y.astype(jnp.float32), y_ref, atol=1.5e-1, rtol=5e-2), \
        "bf16 test failed"

    print("KERNEL_OK")
</pallas_src>

<mosaic_0001>
module attributes {stable_mosaic.version = 11 : i64} {
  func.func @kernel(%arg0: i32, %arg1: i32, %arg2: i32, %arg3: memref<8x128xf32, #tpu.memory_space<vmem>>, %arg4: memref<128x128xf32, #tpu.memory_space<vmem>>, %arg5: memref<1x128xf32, #tpu.memory_space<vmem>>, %arg6: memref<8x128xf32, #tpu.memory_space<vmem>>) attributes {dimension_semantics = [#tpu.dimension_semantics<parallel>, #tpu.dimension_semantics<parallel>, #tpu.dimension_semantics<arbitrary>], iteration_bounds = array<i64: 1, 1, 1>, scalar_prefetch = 0 : i64, scratch_operands = 0 : i64, tpu.core_type = #tpu.core_type<tc>, window_params = [{transform_indices = @transform_0, window_bounds = array<i64: 8, 128>}, {transform_indices = @transform_1, window_bounds = array<i64: 128, 128>}, {transform_indices = @transform_2, window_bounds = array<i64: 1, 128>}, {transform_indices = @transform_3, window_bounds = array<i64: 8, 128>}]} {
    %c0_i32 = arith.constant 0 : i32
    %0 = arith.cmpi eq, %arg2, %c0_i32 : i32
    %1 = arith.extui %0 : i1 to i32
    %c0_i32_0 = arith.constant 0 : i32
    %2 = arith.cmpi ne, %1, %c0_i32_0 : i32
    scf.if %2 {
      %c0_8 = arith.constant 0 : index
      %c0_9 = arith.constant 0 : index
      %9 = vector.load %arg5[%c0_8, %c0_9] : memref<1x128xf32, #tpu.memory_space<vmem>>, vector<1x128xf32>
      %10 = vector.shape_cast %9 : vector<1x128xf32> to vector<1x128xf32>
      %11 = vector.broadcast %10 : vector<1x128xf32> to vector<8x128xf32>
      %c0_10 = arith.constant 0 : index
      %c0_11 = arith.constant 0 : index
      %12 = vector.load %arg6[%c0_10, %c0_11] : memref<8x128xf32, #tpu.memory_space<vmem>>, vector<8x128xf32>
      tpu.vector_store %arg6[%c0_10, %c0_11], %11 {strides = array<i32>} : memref<8x128xf32, #tpu.memory_space<vmem>>, vector<8x128xf32>,
    } else {
    }
    %c0 = arith.constant 0 : index
    %c0_1 = arith.constant 0 : index
    %3 = vector.load %arg3[%c0, %c0_1] : memref<8x128xf32, #tpu.memory_space<vmem>>, vector<8x128xf32>
    %c0_2 = arith.constant 0 : index
    %c0_3 = arith.constant 0 : index
    %4 = vector.load %arg4[%c0_2, %c0_3] : memref<128x128xf32, #tpu.memory_space<vmem>>, vector<128x128xf32>
    %c0_4 = arith.constant 0 : index
    %c0_5 = arith.constant 0 : index
    %5 = vector.load %arg6[%c0_4, %c0_5] : memref<8x128xf32, #tpu.memory_space<vmem>>, vector<8x128xf32>
    %cst = arith.constant dense<0.000000e+00> : vector<8x128xf32>
    %6 = tpu.matmul %3, %4, %cst {dimension_numbers = #tpu.dot_dimension_numbers<[1], [0], [0], [1], [0, 0, 1, 1], [], []>} : vector<8x128xf32>, vector<128x128xf32>, vector<8x128xf32> -> vector<8x128xf32>
    %7 = arith.addf %5, %6 : vector<8x128xf32>
    %c0_6 = arith.constant 0 : index
    %c0_7 = arith.constant 0 : index
    %8 = vector.load %arg6[%c0_6, %c0_7] : memref<8x128xf32, #tpu.memory_space<vmem>>, vector<8x128xf32>
    tpu.vector_store %arg6[%c0_6, %c0_7], %7 {strides = array<i32>} : memref<8x128xf32, #tpu.memory_space<vmem>>, vector<8x128xf32>,
    return
  }
  func.func @transform_0(%arg0: i32, %arg1: i32, %arg2: i32) -> (i32, i32) {
    %c0_i32 = arith.constant 0 : i32
    return %arg0, %arg2 : i32, i32
  }
  func.func @transform_1(%arg0: i32, %arg1: i32, %arg2: i32) -> (i32, i32) {
    %c0_i32 = arith.constant 0 : i32
    return %arg2, %arg1 : i32, i32
  }
  func.func @transform_2(%arg0: i32, %arg1: i32, %arg2: i32) -> (i32, i32) {
    %c0_i32 = arith.constant 0 : i32
    %c0_i32_0 = arith.constant 0 : i32
    return %c0_i32, %arg1 : i32, i32
  }
  func.func @transform_3(%arg0: i32, %arg1: i32, %arg2: i32) -> (i32, i32) {
    %c0_i32 = arith.constant 0 : i32
    return %arg0, %arg1 : i32, i32
  }
}

</mosaic_0001>

<llo_original>
// kernel: _dense_pallas_2d.1
$region0: #{_dense_pallas_2d.1}
  #allocation0 [shape = 'u32[]', space=smem, size = 0x4, offset = 0x4, fixed_abs, tag = 'smem constant byte address 0x4 - core index']
  #allocation1 [shape = 'u32[144,128]{1,0:T(1,128)}', space=vmem, size = 0x12000, scoped, tag = 'internal scratch']
  %s0 = inlined_call_operand.vmem [shape: f32[8,128], index: 0, kind: input, shape index: {}]
  %s1 = inlined_call_operand.hbm [shape: f32[128,128], index: 1, kind: input, shape index: {}]
  %s2 = inlined_call_operand.vmem [shape: f32[1,128], index: 2, kind: input, shape index: {}]
  %s3 = inlined_call_operand.vmem [shape: f32[8,128], index: 3, kind: output, shape index: {}]
  %s4 = sld [smem:[#allocation0]]
  $region30: #{_dense_pallas_2d.1} parent=0
    _
  %s6 = ssub.s32 1, %s4
  %s7 = scalar_select 0, %s6, %s4
  $region1: #{_dense_pallas_2d.1} parent=0
    #allocation2 [shape = 'u8[65536]{0}', space=vmem, size = 0x10000, scoped, tag = 'input window, operand 1, single buffered']
    #allocation3 [shape = 's32[1]{0}', space=sflag, size = 0x4, scoped, tag = 'scoped memory for _dense_pallas_2d.1']
    %8 = vsyncpa [#allocation3], 0
    // Predicated region
    $region2: #{_dense_pallas_2d.1} parent=1 // pred_check
      _
    $region3: #{_dense_pallas_2d.1} parent=1 // pred_check_branch
      %10 = sbr.rel (0) target = $region5
    $region4: #{_dense_pallas_2d.1} parent=1 // pred_region
      _
    $region5: #{_dense_pallas_2d.1} parent=1 // pred_fallthru
      _
    // Predicated region
    $region6: #{_dense_pallas_2d.1} parent=1 // pred_check
      _
    $region7: #{_dense_pallas_2d.1} parent=1 // pred_check_branch
      %12 = sbr.rel (0) target = $region9
    $region8: #{_dense_pallas_2d.1} parent=1 // pred_region
      %s14 = ssub.s32 2048, 2048
      %15 = vsyncadd [#allocation3], %s14
      %s16 = sshll.u32 [#allocation2], 4
      %s17 = int_to_ptr.vmem [resolvable:$true] %s16
      %22 = dma.hbm_to_vmem [thread:$0]  %s1, 2048, %s17, [#allocation3], 128, 128, 8
    $region9: #{_dense_pallas_2d.1} parent=1 // pred_fallthru
      _
    // Predicated region
    $region10: #{_dense_pallas_2d.1} parent=1 // pred_check
      _
    $region11: #{_dense_pallas_2d.1} parent=1 // pred_check_branch
      %24 = sbr.rel (0) target = $region13
    $region12: #{_dense_pallas_2d.1} parent=1 // pred_region
      _
    $region13: #{_dense_pallas_2d.1} parent=1 // pred_fallthru
      _
    // Predicated region
    $region14: #{_dense_pallas_2d.1} parent=1 // pred_check
      _
    $region15: #{_dense_pallas_2d.1} parent=1 // pred_check_branch
      %26 = sbr.rel (0) target = $region17
    $region16: #{_dense_pallas_2d.1} parent=1 // pred_region
      %27 = dma.done [#allocation3], 2048
    $region17: #{_dense_pallas_2d.1} parent=1 // pred_fallthru
      _
    %p28 = scmp.eq.s32.totalorder 0, 0
    // Predicated region
    $region18: #{_dense_pallas_2d.1} parent=1 // pred_check
      %p29 = pneg %p28
    $region19: #{_dense_pallas_2d.1} parent=1 // pred_check_branch
      %31 = sbr.rel (%p29) target = $region21
    $region20: #{_dense_pallas_2d.1} parent=1 // pred_region
      %v32 = vld [vmem:[%s2] sm:$0x1]
      %v34 = vlaneseq
      %v35 = vshrl.u32 %v34, 7
      %v36 = vsub.s32 0, %v35
      %v37 = vrot.slane %v32, %v36
      %39 = vst [vmem:[%s3] sm:$0xff] %v37
    $region21: #{_dense_pallas_2d.1} parent=1 // pred_fallthru
      _
    %v40 = vld [vmem:[%s0] sm:$0xff]
    %v41 = vld [vmem:[#allocation2] sm:$0xff]
    %v42 = vld [vmem:[#allocation2 + $0x8] sm:$0xff]
    %v43 = vld [vmem:[#allocation2 + $0x10] sm:$0xff]
    %v44 = vld [vmem:[#allocation2 + $0x18] sm:$0xff]
    %v45 = vld [vmem:[#allocation2 + $0x20] sm:$0xff]
    %v46 = vld [vmem:[#allocation2 + $0x28] sm:$0xff]
    %v47 = vld [vmem:[#allocation2 + $0x30] sm:$0xff]
    %v48 = vld [vmem:[#allocation2 + $0x38] sm:$0xff]
    %v49 = vld [vmem:[#allocation2 + $0x40] sm:$0xff]
    %v50 = vld [vmem:[#allocation2 + $0x48] sm:$0xff]
    %v51 = vld [vmem:[#allocation2 + $0x50] sm:$0xff]
    %v52 = vld [vmem:[#allocation2 + $0x58] sm:$0xff]
    %v53 = vld [vmem:[#allocation2 + $0x60] sm:$0xff]
    %v54 = vld [vmem:[#allocation2 + $0x68] sm:$0xff]
    %v55 = vld [vmem:[#allocation2 + $0x70] sm:$0xff]
    %v56 = vld [vmem:[#allocation2 + $0x78] sm:$0xff]
    %v57 = vld [vmem:[%s3] sm:$0xff]
    %58 = vmatprep.subr.mxu0 0.0
    %59 = vmatpush1.msra.mxu0 %v56
    %60 = vmatprep.subr.mxu0 0.0
    %61 = vmatpush1.msra.mxu0 %v55
    %62 = vmatprep.subr.mxu0 0.0
    %63 = vmatpush1.msra.mxu0 %v54
    %64 = vmatprep.subr.mxu0 0.0
    %65 = vmatpush1.msra.mxu0 %v53
    %66 = vmatprep.subr.mxu0 0.0
    %67 = vmatpush1.msra.mxu0 %v52
    %68 = vmatprep.subr.mxu0 0.0
    %69 = vmatpush1.msra.mxu0 %v51
    %70 = vmatprep.subr.mxu0 0.0
    %71 = vmatpush1.msra.mxu0 %v50
    %72 = vmatprep.subr.mxu0 0.0
    %73 = vmatpush1.msra.mxu0 %v49
    %74 = vmatprep.subr.mxu0 0.0
    %75 = vmatpush1.msra.mxu0 %v48
    %76 = vmatprep.subr.mxu0 0.0
    %77 = vmatpush1.msra.mxu0 %v47
    %78 = vmatprep.subr.mxu0 0.0
    %79 = vmatpush1.msra.mxu0 %v46
    %80 = vmatprep.subr.mxu0 0.0
    %81 = vmatpush1.msra.mxu0 %v45
    %82 = vmatprep.subr.mxu0 0.0
    %83 = vmatpush1.msra.mxu0 %v44
    %84 = vmatprep.subr.mxu0 0.0
    %85 = vmatpush1.msra.mxu0 %v43
    %86 = vmatprep.subr.mxu0 0.0
    %87 = vmatpush1.msra.mxu0 %v42
    %88 = vmatprep.subr.mxu0 0.0
    %89 = vmatpush1.msra.mxu0 %v41
    %90 = vmatprep.subr.mxu0 0.0
    %91 = vmatpush2.msra.mxu0 0.0
    %92 = vmatprep.subr.mxu0 0.0
    %93 = vmatpush2.msra.mxu0 0.0
    %94 = vmatprep.subr.mxu0 0.0
    %95 = vmatpush2.msra.mxu0 0.0
    %96 = vmatprep.subr.mxu0 0.0
    %97 = vmatpush2.msra.mxu0 0.0
    %98 = vmatprep.subr.mxu0 0.0
    %99 = vmatpush2.msra.mxu0 0.0
    %100 = vmatprep.subr.mxu0 0.0
    %101 = vmatpush2.msra.mxu0 0.0
    %102 = vmatprep.subr.mxu0 0.0
    %103 = vmatpush2.msra.mxu0 0.0
    %104 = vmatprep.subr.mxu0 0.0
    %105 = vmatpush2.msra.mxu0 0.0
    %106 = vmatprep.subr.mxu0 0.0
    %107 = vmatpush2.msra.mxu0 0.0
    %108 = vmatprep.subr.mxu0 0.0
    %109 = vmatpush2.msra.mxu0 0.0
    %110 = vmatprep.subr.mxu0 0.0
    %111 = vmatpush2.msra.mxu0 0.0
    %112 = vmatprep.subr.mxu0 0.0
    %113 = vmatpush2.msra.mxu0 0.0
    %114 = vmatprep.subr.mxu0 0.0
    %115 = vmatpush2.msra.mxu0 0.0
    %116 = vmatprep.subr.mxu0 0.0
    %117 = vmatpush2.msra.mxu0 0.0
    %118 = vmatprep.subr.mxu0 0.0
    %119 = vmatpush2.msra.mxu0 0.0
    %120 = vmatprep.subr.mxu0 0.0
    %121 = vmatpush2.msra.mxu0 0.0
    %122 = vmatprep.mubr.f32.mxu0 0.0
    %123 = vmatmul.mubr.f32.gmra.mxu0 %v40
    %v124 = vpop.f32.mrf.mxu0
    %v125 = vadd.f32 0.0, %v124
    %v126 = vpop.f32.mrf.mxu0
    %127 = vdwg.mxu0
    %v128 = vadd.f32 %v57, %v125
    %129 = vst [vmem:[%s3] sm:$0xff] %v128
    // Predicated region
    $region22: #{_dense_pallas_2d.1} parent=1 // pred_check
      _
    $region23: #{_dense_pallas_2d.1} parent=1 // pred_check_branch
      %131 = sbr.rel (0) target = $region25
    $region24: #{_dense_pallas_2d.1} parent=1 // pred_region
      _
    $region25: #{_dense_pallas_2d.1} parent=1 // pred_fallthru
      _
    // Predicated region
    $region26: #{_dense_pallas_2d.1} parent=1 // pred_check
      _
    $region27: #{_dense_pallas_2d.1} parent=1 // pred_check_branch
      %133 = sbr.rel (0) target = $region29
    $region28: #{_dense_pallas_2d.1} parent=1 // pred_region
      _
    $region29: #{_dense_pallas_2d.1} parent=1 // pred_fallthru
      _
    %134 = vsyncpa [#allocation3], 1

</llo_original>
